<compile_context>
chip_gen: v6e
topology: v6e:2x2x1
jax: 0.10.0
libtpu: 0.0.40
codegen_flags: <defaults>
</compile_context>

<pallas_src>
import jax
import jax.numpy as jnp
from jax.experimental import pallas as pl
from jax.experimental.pallas import tpu as pltpu


# ----------------------------- Pallas kernel ---------------------------------

def _spl_head_kernel(x_ref, w1_ref, b1_ref, w2_ref, b2_ref, w3_ref, b3_ref,
                     feat_ref, out_ref, sm_ref):
    """Bottleneck + classifier + softmax head of SPLNet (eval semantics, BN folded)."""
    # MXU inputs in bf16, accumulation + elementwise math in f32.
    x = x_ref[...].astype(jnp.bfloat16)                               # (BM, F_in)

    # --- bottleneck_layer: Linear (BN folded in) -> ReLU -> Dropout(id)
    z1 = jnp.dot(x, w1_ref[...], preferred_element_type=jnp.float32) + b1_ref[...]
    feat = jnp.maximum(z1, 0.0)
    feat_ref[...] = feat.astype(feat_ref.dtype)

    # --- classifier_layer: Linear -> ReLU -> Dropout(id) -> Linear (class dim padded)
    h = jnp.maximum(
        jnp.dot(feat.astype(jnp.bfloat16), w2_ref[...],
                preferred_element_type=jnp.float32) + b2_ref[...],
        0.0)
    logits = jnp.dot(h.astype(jnp.bfloat16), w3_ref[...],
                     preferred_element_type=jnp.float32) + b3_ref[...]
    out_ref[...] = logits.astype(out_ref.dtype)

    # --- softmax over (padded) class dim; padded lanes carry -1e30 bias -> exp()=0
    m = jnp.max(logits, axis=1, keepdims=True)
    e = jnp.exp(logits - m)
    inv = pl.reciprocal(jnp.sum(e, axis=1, keepdims=True), approx=True)
    sm_ref[...] = (e * inv).astype(sm_ref.dtype)


# ------------------------------ Host-side helpers -----------------------------

def _fold_bn(w1, b1, gamma, beta, rmean, rvar, eps=1e-5):
    """Fold eval-mode BatchNorm1d into the preceding Linear layer."""
    scale = gamma * jax.lax.rsqrt(rvar + eps)          # (1, D)
    w1f = w1 * scale                                   # broadcast over input rows
    b1f = (b1 - rmean) * scale + beta
    return w1f, b1f


def _choose_batch_tiling(B, max_block=256):
    """Pick (block_b, padded_B): multiple of 8, <= max_block rows per tile."""
    padded = ((B + 7) // 8) * 8
    block = min(max_block, padded)
    padded = ((padded + block - 1) // block) * block
    return block, padded


def spl_head(features_in, params, *, block_b=None):
    """Runs the SPLNet head Pallas kernel on pre-extracted features (B, F_in)."""
    B, F_in = features_in.shape
    w1, b1, gamma, beta, rmean, rvar, w2, b2, w3, b3 = params
    bottleneck_dim = w1.shape[1]
    width = w2.shape[1]
    class_num = w3.shape[1]

    # (1) Fold BN into the first Linear (zero numerical-semantics change in eval mode).
    w1f, b1f = _fold_bn(w1, b1, gamma, beta, rmean, rvar)

    # (2) Lane-dense class dimension: pad to a multiple of 128; padded bias = -1e30
    #     so those lanes vanish from the softmax (exp underflows to 0).
    padded_classes = ((class_num + 127) // 128) * 128
    w3p = jnp.zeros((width, padded_classes), jnp.float32).at[:, :class_num].set(w3)
    b3p = jnp.full((1, padded_classes), -1e30, jnp.float32).at[:, :class_num].set(b3)

    # (3) bf16 matmul operands (f32 accumulation in-kernel).
    w1b = w1f.astype(jnp.bfloat16)
    w2b = w2.astype(jnp.bfloat16)
    w3b = w3p.astype(jnp.bfloat16)

    # (4) Batch tiling.
    if block_b is None:
        block_b, padded_B = _choose_batch_tiling(B)
    else:
        assert block_b % 8 == 0, "block_b must be a multiple of 8"
        padded_B = ((B + block_b - 1) // block_b) * block_b
    x = features_in
    if padded_B != B:
        x = jnp.pad(x, ((0, padded_B - B), (0, 0)))
    grid = (padded_B // block_b,)

    def rep(shape):
        return pl.BlockSpec(shape, lambda i: (0,) * len(shape))

    in_specs = [
        pl.BlockSpec((block_b, F_in), lambda i: (i, 0)),          # x (batch-tiled)
        rep((F_in, bottleneck_dim)),                              # W1 (BN folded, bf16)
        rep((1, bottleneck_dim)),                                 # b1 (BN folded, f32)
        rep((bottleneck_dim, width)),                             # W2 (bf16)
        rep((1, width)),                                          # b2 (f32)
        rep((width, padded_classes)),                             # W3 (padded, bf16)
        rep((1, padded_classes)),                                 # b3 (padded, f32)
    ]
    out_specs = (
        pl.BlockSpec((block_b, bottleneck_dim), lambda i: (i, 0)),
        pl.BlockSpec((block_b, padded_classes), lambda i: (i, 0)),
        pl.BlockSpec((block_b, padded_classes), lambda i: (i, 0)),
    )
    out_shape = (
        jax.ShapeDtypeStruct((padded_B, bottleneck_dim), jnp.float32),
        jax.ShapeDtypeStruct((padded_B, padded_classes), jnp.float32),
        jax.ShapeDtypeStruct((padded_B, padded_classes), jnp.float32),
    )

    # (5) Advisory cost estimate so XLA can overlap this small head with the backbone.
    flops = 2 * padded_B * (F_in * bottleneck_dim
                            + bottleneck_dim * width
                            + width * padded_classes)
    transcendentals = padded_B * padded_classes                   # exp in softmax
    bytes_accessed = (x.size * 4
                      + (w1b.size + w2b.size + w3b.size) * 2
                      + (b1f.size + b2.size + b3p.size) * 4
                      + padded_B * (bottleneck_dim + 2 * padded_classes) * 4)
    cost = pl.CostEstimate(flops=flops,
                           transcendentals=transcendentals,
                           bytes_accessed=bytes_accessed)

    feat, out, sm = pl.pallas_call(
        _spl_head_kernel,
        grid=grid,
        in_specs=in_specs,
        out_specs=out_specs,
        out_shape=out_shape,
        cost_estimate=cost,
        compiler_params=pltpu.CompilerParams(
            dimension_semantics=("parallel",),       # shard batch tiles across cores
            vmem_limit_bytes=48 * 1024 * 1024),      # headroom; fits v7x's 64 MiB/TC
    )(x, w1b, b1f, w2b, b2, w3b, b3p)

    # Strip batch and class padding.
    return feat[:B], out[:B, :class_num], sm[:B, :class_num]


# ------------------------- Parameter initialization ---------------------------

def init_spl_params(key, feat_in, bottleneck_dim=256, width=256, class_num=31):
    """Deterministic init matching SPLNet.__init__ semantics."""
    k1, k2, k3 = jax.random.split(key, 3)
    # bottleneck_layer[0]: weight ~ N(0, 0.005), bias = 0.1
    w1 = 0.005 * jax.random.normal(k1, (feat_in, bottleneck_dim), jnp.float32)
    b1 = jnp.full((1, bottleneck_dim), 0.1, jnp.float32)
    # BatchNorm1d default: gamma=1, beta=0, running_mean=0, running_var=1
    gamma = jnp.ones((1, bottleneck_dim), jnp.float32)
    beta = jnp.zeros((1, bottleneck_dim), jnp.float32)
    rmean = jnp.zeros((1, bottleneck_dim), jnp.float32)
    rvar = jnp.ones((1, bottleneck_dim), jnp.float32)
    # classifier_layer[0] and [3]: weight ~ N(0, 0.01), bias = 0.0
    w2 = 0.01 * jax.random.normal(k2, (bottleneck_dim, width), jnp.float32)
    b2 = jnp.zeros((1, width), jnp.float32)
    w3 = 0.01 * jax.random.normal(k3, (width, class_num), jnp.float32)
    b3 = jnp.zeros((1, class_num), jnp.float32)
    return (w1, b1, gamma, beta, rmean, rvar, w2, b2, w3, b3)


# ------------------------------ SPLNet forward --------------------------------

def splnet_forward(images_nchw, backbone_proj, head_params):
    """Full SPLNet forward: stub backbone (glue) + Pallas head kernel."""
    # Stub backbone: global average pool over spatial dims, then fixed linear
    # projection to the backbone output dimension.
    # TODO(synk): ResNet50 backbone (external backbone.network_dict) not translated.
    pooled = jnp.mean(images_nchw, axis=(2, 3))          # (B, C)
    base_features = pooled @ backbone_proj               # (B, feat_in)
    features, outputs, softmax_outputs = spl_head(base_features, head_params)
    return features, outputs, softmax_outputs


# ------------------------------ Reference check --------------------------------

def _reference_head(x, params):
    w1, b1, gamma, beta, rmean, rvar, w2, b2, w3, b3 = params
    z1 = x @ w1 + b1
    z1 = (z1 - rmean) / jnp.sqrt(rvar + 1e-5) * gamma + beta
    feat = jnp.maximum(z1, 0.0)
    h = jnp.maximum(feat @ w2 + b2, 0.0)
    logits = h @ w3 + b3
    sm = jax.nn.softmax(logits, axis=1)
    return feat, logits, sm


if __name__ == "__main__":
    key = jax.random.PRNGKey(0)
    k_img, k_proj, k_params = jax.random.split(key, 3)

    # Small shapes consistent with the module: NCHW images, stand-in feature dim.
    B, C, H, W = 8, 4, 16, 16
    FEAT_IN = 512          # stand-in for ResNet50's 2048-d output
    BOTTLENECK = 256
    WIDTH = 256
    CLASS_NUM = 31

    images = jax.random.normal(k_img, (B, C, H, W), jnp.float32)
    backbone_proj = jax.random.normal(k_proj, (C, FEAT_IN), jnp.float32) * 0.1
    head_params = init_spl_params(k_params, FEAT_IN, BOTTLENECK, WIDTH, CLASS_NUM)

    features, outputs, softmax_outputs = jax.jit(splnet_forward)(
        images, backbone_proj, head_params)
    jax.block_until_ready((features, outputs, softmax_outputs))

    # Numerical check against plain-JAX f32 reference (kernel uses bf16 matmul
    # inputs with f32 accumulation, hence the slightly relaxed tolerances).
    base_features = jnp.mean(images, axis=(2, 3)) @ backbone_proj
    ref_f, ref_o, ref_s = _reference_head(base_features, head_params)
    assert features.shape == (B, BOTTLENECK)
    assert outputs.shape == (B, CLASS_NUM)
    assert softmax_outputs.shape == (B, CLASS_NUM)
    assert jnp.allclose(features, ref_f, atol=5e-3, rtol=2e-2)
    assert jnp.allclose(outputs, ref_o, atol=5e-3, rtol=2e-2)
    assert jnp.allclose(softmax_outputs, ref_s, atol=5e-3, rtol=2e-2)

    print("KERNEL_OK")
</pallas_src>

<mosaic_0001>
module attributes {stable_mosaic.version = 11 : i64} {
  func.func @_spl_head_kernel(%arg0: i32, %arg1: memref<8x512xf32, #tpu.memory_space<vmem>>, %arg2: memref<512x256xbf16, #tpu.memory_space<vmem>>, %arg3: memref<1x256xf32, #tpu.memory_space<vmem>>, %arg4: memref<256x256xbf16, #tpu.memory_space<vmem>>, %arg5: memref<1x256xf32, #tpu.memory_space<vmem>>, %arg6: memref<256x128xbf16, #tpu.memory_space<vmem>>, %arg7: memref<1x128xf32, #tpu.memory_space<vmem>>, %arg8: memref<8x256xf32, #tpu.memory_space<vmem>>, %arg9: memref<8x128xf32, #tpu.memory_space<vmem>>, %arg10: memref<8x128xf32, #tpu.memory_space<vmem>>) attributes {dimension_semantics = [#tpu.dimension_semantics<parallel>], iteration_bounds = array<i64: 1>, scalar_prefetch = 0 : i64, scratch_operands = 0 : i64, tpu.core_type = #tpu.core_type<tc>, window_params = [{transform_indices = @transform_0, window_bounds = array<i64: 8, 512>}, {pipeline_mode = #tpu.pipeline_mode<synchronous>, transform_indices = @transform_1, window_bounds = array<i64: 512, 256>}, {pipeline_mode = #tpu.pipeline_mode<synchronous>, transform_indices = @transform_2, window_bounds = array<i64: 1, 256>}, {pipeline_mode = #tpu.pipeline_mode<synchronous>, transform_indices = @transform_3, window_bounds = array<i64: 256, 256>}, {pipeline_mode = #tpu.pipeline_mode<synchronous>, transform_indices = @transform_4, window_bounds = array<i64: 1, 256>}, {pipeline_mode = #tpu.pipeline_mode<synchronous>, transform_indices = @transform_5, window_bounds = array<i64: 256, 128>}, {pipeline_mode = #tpu.pipeline_mode<synchronous>, transform_indices = @transform_6, window_bounds = array<i64: 1, 128>}, {transform_indices = @transform_7, window_bounds = array<i64: 8, 256>}, {transform_indices = @transform_8, window_bounds = array<i64: 8, 128>}, {transform_indices = @transform_9, window_bounds = array<i64: 8, 128>}]} {
    %c0 = arith.constant 0 : index
    %c0_0 = arith.constant 0 : index
    %0 = vector.load %arg1[%c0, %c0_0] : memref<8x512xf32, #tpu.memory_space<vmem>>, vector<8x512xf32>
    %1 = arith.truncf %0 : vector<8x512xf32> to vector<8x512xbf16>
    %c0_1 = arith.constant 0 : index
    %c0_2 = arith.constant 0 : index
    %2 = vector.load %arg2[%c0_1, %c0_2] : memref<512x256xbf16, #tpu.memory_space<vmem>>, vector<512x256xbf16>
    %cst = arith.constant dense<0.000000e+00> : vector<8x256xf32>
    %3 = tpu.matmul %1, %2, %cst {dimension_numbers = #tpu.dot_dimension_numbers<[1], [0], [0], [1], [0, 0, 1, 1], [], []>} : vector<8x512xbf16>, vector<512x256xbf16>, vector<8x256xf32> -> vector<8x256xf32>
    %c0_3 = arith.constant 0 : index
    %c0_4 = arith.constant 0 : index
    %4 = vector.load %arg3[%c0_3, %c0_4] : memref<1x256xf32, #tpu.memory_space<vmem>>, vector<1x256xf32>
    %5 = vector.broadcast %4 : vector<1x256xf32> to vector<8x256xf32>
    %6 = arith.addf %3, %5 : vector<8x256xf32>
    %cst_5 = arith.constant 0.000000e+00 : f32
    %7 = vector.broadcast %cst_5 : f32 to vector<8x256xf32>
    %8 = arith.maximumf %6, %7 : vector<8x256xf32>
    %c0_6 = arith.constant 0 : index
    %c0_7 = arith.constant 0 : index
    %9 = vector.load %arg8[%c0_6, %c0_7] : memref<8x256xf32, #tpu.memory_space<vmem>>, vector<8x256xf32>
    tpu.vector_store %arg8[%c0_6, %c0_7], %8 {strides = array<i32>} : memref<8x256xf32, #tpu.memory_space<vmem>>, vector<8x256xf32>,
    %10 = arith.truncf %8 : vector<8x256xf32> to vector<8x256xbf16>
    %c0_8 = arith.constant 0 : index
    %c0_9 = arith.constant 0 : index
    %11 = vector.load %arg4[%c0_8, %c0_9] : memref<256x256xbf16, #tpu.memory_space<vmem>>, vector<256x256xbf16>
    %cst_10 = arith.constant dense<0.000000e+00> : vector<8x256xf32>
    %12 = tpu.matmul %10, %11, %cst_10 {dimension_numbers = #tpu.dot_dimension_numbers<[1], [0], [0], [1], [0, 0, 1, 1], [], []>} : vector<8x256xbf16>, vector<256x256xbf16>, vector<8x256xf32> -> vector<8x256xf32>
    %c0_11 = arith.constant 0 : index
    %c0_12 = arith.constant 0 : index
    %13 = vector.load %arg5[%c0_11, %c0_12] : memref<1x256xf32, #tpu.memory_space<vmem>>, vector<1x256xf32>
    %14 = vector.broadcast %13 : vector<1x256xf32> to vector<8x256xf32>
    %15 = arith.addf %12, %14 : vector<8x256xf32>
    %cst_13 = arith.constant 0.000000e+00 : f32
    %16 = vector.broadcast %cst_13 : f32 to vector<8x256xf32>
    %17 = arith.maximumf %15, %16 : vector<8x256xf32>
    %18 = arith.truncf %17 : vector<8x256xf32> to vector<8x256xbf16>
    %c0_14 = arith.constant 0 : index
    %c0_15 = arith.constant 0 : index
    %19 = vector.load %arg6[%c0_14, %c0_15] : memref<256x128xbf16, #tpu.memory_space<vmem>>, vector<256x128xbf16>
    %cst_16 = arith.constant dense<0.000000e+00> : vector<8x128xf32>
    %20 = tpu.matmul %18, %19, %cst_16 {dimension_numbers = #tpu.dot_dimension_numbers<[1], [0], [0], [1], [0, 0, 1, 1], [], []>} : vector<8x256xbf16>, vector<256x128xbf16>, vector<8x128xf32> -> vector<8x128xf32>
    %c0_17 = arith.constant 0 : index
    %c0_18 = arith.constant 0 : index
    %21 = vector.load %arg7[%c0_17, %c0_18] : memref<1x128xf32, #tpu.memory_space<vmem>>, vector<1x128xf32>
    %22 = vector.broadcast %21 : vector<1x128xf32> to vector<8x128xf32>
    %23 = arith.addf %20, %22 : vector<8x128xf32>
    %c0_19 = arith.constant 0 : index
    %c0_20 = arith.constant 0 : index
    %24 = vector.load %arg9[%c0_19, %c0_20] : memref<8x128xf32, #tpu.memory_space<vmem>>, vector<8x128xf32>
    tpu.vector_store %arg9[%c0_19, %c0_20], %23 {strides = array<i32>} : memref<8x128xf32, #tpu.memory_space<vmem>>, vector<8x128xf32>,
    %cst_21 = arith.constant dense<0xFF800000> : vector<8xf32>
    %25 = vector.multi_reduction <maximumf>, %23, %cst_21 [1] : vector<8x128xf32> to vector<8xf32>
    %26 = vector.shape_cast %25 : vector<8xf32> to vector<8x1xf32>
    %27 = vector.broadcast %26 : vector<8x1xf32> to vector<8x128xf32>
    %28 = arith.subf %23, %27 : vector<8x128xf32>
    %29 = math.exp %28 : vector<8x128xf32>
    %cst_22 = arith.constant dense<0.000000e+00> : vector<8xf32>
    %30 = vector.multi_reduction <add>, %29, %cst_22 [1] : vector<8x128xf32> to vector<8xf32>
    %31 = vector.shape_cast %30 : vector<8xf32> to vector<8x1xf32>
    %32 = tpu.reciprocal %31 {approx = true} : vector<8x1xf32> -> vector<8x1xf32>
    %33 = vector.broadcast %32 : vector<8x1xf32> to vector<8x128xf32>
    %34 = arith.mulf %29, %33 : vector<8x128xf32>
    %c0_23 = arith.constant 0 : index
    %c0_24 = arith.constant 0 : index
    %35 = vector.load %arg10[%c0_23, %c0_24] : memref<8x128xf32, #tpu.memory_space<vmem>>, vector<8x128xf32>
    tpu.vector_store %arg10[%c0_23, %c0_24], %34 {strides = array<i32>} : memref<8x128xf32, #tpu.memory_space<vmem>>, vector<8x128xf32>,
    return
  }
  func.func @transform_0(%arg0: i32) -> (i32, i32) {
    %c0_i32 = arith.constant 0 : i32
    %c0_i32_0 = arith.constant 0 : i32
    return %arg0, %c0_i32 : i32, i32
  }
  func.func @transform_1(%arg0: i32) -> (i32, i32) {
    %c0_i32 = arith.constant 0 : i32
    %c0_i32_0 = arith.constant 0 : i32
    %c0_i32_1 = arith.constant 0 : i32
    return %c0_i32, %c0_i32_0 : i32, i32
  }
  func.func @transform_2(%arg0: i32) -> (i32, i32) {
    %c0_i32 = arith.constant 0 : i32
    %c0_i32_0 = arith.constant 0 : i32
    %c0_i32_1 = arith.constant 0 : i32
    return %c0_i32, %c0_i32_0 : i32, i32
  }
  func.func @transform_3(%arg0: i32) -> (i32, i32) {
    %c0_i32 = arith.constant 0 : i32
    %c0_i32_0 = arith.constant 0 : i32
    %c0_i32_1 = arith.constant 0 : i32
    return %c0_i32, %c0_i32_0 : i32, i32
  }
  func.func @transform_4(%arg0: i32) -> (i32, i32) {
    %c0_i32 = arith.constant 0 : i32
    %c0_i32_0 = arith.constant 0 : i32
    %c0_i32_1 = arith.constant 0 : i32
    return %c0_i32, %c0_i32_0 : i32, i32
  }
  func.func @transform_5(%arg0: i32) -> (i32, i32) {
    %c0_i32 = arith.constant 0 : i32
    %c0_i32_0 = arith.constant 0 : i32
    %c0_i32_1 = arith.constant 0 : i32
    return %c0_i32, %c0_i32_0 : i32, i32
  }
  func.func @transform_6(%arg0: i32) -> (i32, i32) {
    %c0_i32 = arith.constant 0 : i32
    %c0_i32_0 = arith.constant 0 : i32
    %c0_i32_1 = arith.constant 0 : i32
    return %c0_i32, %c0_i32_0 : i32, i32
  }
  func.func @transform_7(%arg0: i32) -> (i32, i32) {
    %c0_i32 = arith.constant 0 : i32
    %c0_i32_0 = arith.constant 0 : i32
    return %arg0, %c0_i32 : i32, i32
  }
  func.func @transform_8(%arg0: i32) -> (i32, i32) {
    %c0_i32 = arith.constant 0 : i32
    %c0_i32_0 = arith.constant 0 : i32
    return %arg0, %c0_i32 : i32, i32
  }
  func.func @transform_9(%arg0: i32) -> (i32, i32) {
    %c0_i32 = arith.constant 0 : i32
    %c0_i32_0 = arith.constant 0 : i32
    return %arg0, %c0_i32 : i32, i32
  }
}

</mosaic_0001>

<llo_original>
// kernel: splnet_forward.1
$region0: #{splnet_forward.1}
  #allocation0 [shape = 'u32[]', space=smem, size = 0x4, offset = 0x4, fixed_abs, tag = 'smem constant byte address 0x4 - core index']
  #allocation1 [shape = 'u32[144,128]{1,0:T(1,128)}', space=vmem, size = 0x12000, scoped, tag = 'internal scratch']
  %s0 = inlined_call_operand.vmem [shape: f32[8,512], index: 0, kind: input, shape index: {}]
  %s1 = inlined_call_operand.vmem [shape: bf16[512,256], index: 1, kind: input, shape index: {}]
  %s2 = inlined_call_operand.vmem [shape: f32[1,256], index: 2, kind: input, shape index: {}]
  %s3 = inlined_call_operand.vmem [shape: bf16[256,256], index: 3, kind: input, shape index: {}]
  %s4 = inlined_call_operand.vmem [shape: f32[1,256], index: 4, kind: input, shape index: {}]
  %s5 = inlined_call_operand.vmem [shape: bf16[256,128], index: 5, kind: input, shape index: {}]
  %s6 = inlined_call_operand.vmem [shape: f32[1,128], index: 6, kind: input, shape index: {}]
  %s7 = inlined_call_operand.hbm [shape: f32[8,256], index: 7, kind: output, shape index: {0}]
  %s8 = inlined_call_operand.hbm [shape: f32[8,128], index: 8, kind: output, shape index: {1}]
  %s9 = inlined_call_operand.hbm [shape: f32[8,128], index: 9, kind: output, shape index: {2}]
  %10 = xla_tuple %s7, %s8, %s9
  %s11 = sld [smem:[#allocation0]]
  $region54: #{splnet_forward.1} parent=0
    _
  %s13 = ssub.s32 1, %s11
  %s14 = scalar_select 0, %s13, %s11
  $region1: #{splnet_forward.1} parent=0
    #allocation2 [shape = 'u8[8192]{0}', space=vmem, size = 0x2000, scoped, tag = 'output window, operand 0, single buffered']
    #allocation3 [shape = 's32[1]{0}', space=sflag, size = 0x4, scoped, tag = 'scoped memory for splnet_forward.1']
    #allocation4 [shape = 'u8[4096]{0}', space=vmem, size = 0x1000, scoped, tag = 'output window, operand 1, single buffered']
    #allocation5 [shape = 's32[1]{0}', space=sflag, size = 0x4, scoped, tag = 'scoped memory for splnet_forward.1']
    #allocation6 [shape = 'u8[4096]{0}', space=vmem, size = 0x1000, scoped, tag = 'output window, operand 2, single buffered']
    %15 = vsyncpa [#allocation3], 0
    %16 = vsyncpa [#allocation5], 0
    // Predicated region
    $region2: #{splnet_forward.1} parent=1 // pred_check
      _
    $region3: #{splnet_forward.1} parent=1 // pred_check_branch
      %18 = sbr.rel (0) target = $region5
    $region4: #{splnet_forward.1} parent=1 // pred_region
      _
    $region5: #{splnet_forward.1} parent=1 // pred_fallthru
      _
    // Predicated region
    $region6: #{splnet_forward.1} parent=1 // pred_check
      _
    $region7: #{splnet_forward.1} parent=1 // pred_check_branch
      %20 = sbr.rel (0) target = $region9
    $region8: #{splnet_forward.1} parent=1 // pred_region
      _
    $region9: #{splnet_forward.1} parent=1 // pred_fallthru
      _
    // Predicated region
    $region10: #{splnet_forward.1} parent=1 // pred_check
      _
    $region11: #{splnet_forward.1} parent=1 // pred_check_branch
      %22 = sbr.rel (0) target = $region13
    $region12: #{splnet_forward.1} parent=1 // pred_region
      _
    $region13: #{splnet_forward.1} parent=1 // pred_fallthru
      _
    // Predicated region
    $region14: #{splnet_forward.1} parent=1 // pred_check
      _
    $region15: #{splnet_forward.1} parent=1 // pred_check_branch
      %24 = sbr.rel (0) target = $region17
    $region16: #{splnet_forward.1} parent=1 // pred_region
      _
    $region17: #{splnet_forward.1} parent=1 // pred_fallthru
      _
    // Predicated region
    $region18: #{splnet_forward.1} parent=1 // pred_check
      _
    $region19: #{splnet_forward.1} parent=1 // pred_check_branch
      %26 = sbr.rel (0) target = $region21
    $region20: #{splnet_forward.1} parent=1 // pred_region
      _
    $region21: #{splnet_forward.1} parent=1 // pred_fallthru
      _
    // Predicated region
    $region22: #{splnet_forward.1} parent=1 // pred_check
      _
    $region23: #{splnet_forward.1} parent=1 // pred_check_branch
      %28 = sbr.rel (0) target = $region25
    $region24: #{splnet_forward.1} parent=1 // pred_region
      _
    $region25: #{splnet_forward.1} parent=1 // pred_fallthru
      _
    // Predicated region
    $region26: #{splnet_forward.1} parent=1 // pred_check
      _
    $region27: #{splnet_forward.1} parent=1 // pred_check_branch
      %30 = sbr.rel (0) target = $region29
    $region28: #{splnet_forward.1} parent=1 // pred_region
      _
    $region29: #{splnet_forward.1} parent=1 // pred_fallthru
      _
    %v32 = vld [vmem:[%s0] sm:$0xff]
    %v33 = vld [vmem:[%s0 + $0x8] sm:$0xff]
    %v34 = vld [vmem:[%s0 + $0x10] sm:$0xff]
    %v35 = vld [vmem:[%s0 + $0x18] sm:$0xff]
    %v36 = vpack.c.bf16 %v32, %v32
    %v37 = vpack.c.bf16 %v33, %v33
    %v38 = vpack.c.bf16 %v34, %v34
    %v39 = vpack.c.bf16 %v35, %v35
    %v40 = vld [vmem:[%s1] sm:$0xff]
    %v41 = vld [vmem:[%s1 + $0x8] sm:$0xff]
    %v42 = vld [vmem:[%s1 + $0x10] sm:$0xff]
    %v43 = vld [vmem:[%s1 + $0x18] sm:$0xff]
    %v44 = vld [vmem:[%s1 + $0x20] sm:$0xff]
    %v45 = vld [vmem:[%s1 + $0x28] sm:$0xff]
    %v46 = vld [vmem:[%s1 + $0x30] sm:$0xff]
    %v47 = vld [vmem:[%s1 + $0x38] sm:$0xff]
    %v48 = vld [vmem:[%s1 + $0x40] sm:$0xff]
    %v49 = vld [vmem:[%s1 + $0x48] sm:$0xff]
    %v50 = vld [vmem:[%s1 + $0x50] sm:$0xff]
    %v51 = vld [vmem:[%s1 + $0x58] sm:$0xff]
    %v52 = vld [vmem:[%s1 + $0x60] sm:$0xff]
    %v53 = vld [vmem:[%s1 + $0x68] sm:$0xff]
    %v54 = vld [vmem:[%s1 + $0x70] sm:$0xff]
    %v55 = vld [vmem:[%s1 + $0x78] sm:$0xff]
    %v56 = vld [vmem:[%s1 + $0x80] sm:$0xff]
    %v57 = vld [vmem:[%s1 + $0x88] sm:$0xff]
    %v58 = vld [vmem:[%s1 + $0x90] sm:$0xff]
    %v59 = vld [vmem:[%s1 + $0x98] sm:$0xff]
    %v60 = vld [vmem:[%s1 + $0xa0] sm:$0xff]
    %v61 = vld [vmem:[%s1 + $0xa8] sm:$0xff]
    %v62 = vld [vmem:[%s1 + $0xb0] sm:$0xff]
    %v63 = vld [vmem:[%s1 + $0xb8] sm:$0xff]
    %v64 = vld [vmem:[%s1 + $0xc0] sm:$0xff]
    %v65 = vld [vmem:[%s1 + $0xc8] sm:$0xff]
    %v66 = vld [vmem:[%s1 + $0xd0] sm:$0xff]
    %v67 = vld [vmem:[%s1 + $0xd8] sm:$0xff]
    %v68 = vld [vmem:[%s1 + $0xe0] sm:$0xff]
    %v69 = vld [vmem:[%s1 + $0xe8] sm:$0xff]
    %v70 = vld [vmem:[%s1 + $0xf0] sm:$0xff]
    %v71 = vld [vmem:[%s1 + $0xf8] sm:$0xff]
    %v72 = vld [vmem:[%s1 + $0x100] sm:$0xff]
    %v73 = vld [vmem:[%s1 + $0x108] sm:$0xff]
    %v74 = vld [vmem:[%s1 + $0x110] sm:$0xff]
    %v75 = vld [vmem:[%s1 + $0x118] sm:$0xff]
    %v76 = vld [vmem:[%s1 + $0x120] sm:$0xff]
    %v77 = vld [vmem:[%s1 + $0x128] sm:$0xff]
    %v78 = vld [vmem:[%s1 + $0x130] sm:$0xff]
    %v79 = vld [vmem:[%s1 + $0x138] sm:$0xff]
    %v80 = vld [vmem:[%s1 + $0x140] sm:$0xff]
    %v81 = vld [vmem:[%s1 + $0x148] sm:$0xff]
    %v82 = vld [vmem:[%s1 + $0x150] sm:$0xff]
    %v83 = vld [vmem:[%s1 + $0x158] sm:$0xff]
    %v84 = vld [vmem:[%s1 + $0x160] sm:$0xff]
    %v85 = vld [vmem:[%s1 + $0x168] sm:$0xff]
    %v86 = vld [vmem:[%s1 + $0x170] sm:$0xff]
    %v87 = vld [vmem:[%s1 + $0x178] sm:$0xff]
    %v88 = vld [vmem:[%s1 + $0x180] sm:$0xff]
    %v89 = vld [vmem:[%s1 + $0x188] sm:$0xff]
    %v90 = vld [vmem:[%s1 + $0x190] sm:$0xff]
    %v91 = vld [vmem:[%s1 + $0x198] sm:$0xff]
    %v92 = vld [vmem:[%s1 + $0x1a0] sm:$0xff]
    %v93 = vld [vmem:[%s1 + $0x1a8] sm:$0xff]
    %v94 = vld [vmem:[%s1 + $0x1b0] sm:$0xff]
    %v95 = vld [vmem:[%s1 + $0x1b8] sm:$0xff]
    %v96 = vld [vmem:[%s1 + $0x1c0] sm:$0xff]
    %v97 = vld [vmem:[%s1 + $0x1c8] sm:$0xff]
    %v98 = vld [vmem:[%s1 + $0x1d0] sm:$0xff]
    %v99 = vld [vmem:[%s1 + $0x1d8] sm:$0xff]
    %v100 = vld [vmem:[%s1 + $0x1e0] sm:$0xff]
    %v101 = vld [vmem:[%s1 + $0x1e8] sm:$0xff]
    %v102 = vld [vmem:[%s1 + $0x1f0] sm:$0xff]
    %v103 = vld [vmem:[%s1 + $0x1f8] sm:$0xff]
    %v104 = vld [vmem:[%s2] sm:$0x3]
    %v106 = vlaneseq
    %v107 = vshrl.u32 %v106, 7
    %v108 = vsub.s32 0, %v107
    %v109 = vrot.slane %v104, %v108
    %v110 = vlaneseq
    %v111 = vshrl.u32 %v110, 7
    %v112 = vsub.s32 1, %v111
    %v113 = vrot.slane %v104, %v112
    %v180 = vunpack.c.l.b16 %v40
    %v181 = vunpack.c.h.b16 %v40
    %v182 = vunpack.c.l.b16 %v41
    %v183 = vunpack.c.h.b16 %v41
    %v184 = vunpack.c.l.b16 %v42
    %v185 = vunpack.c.h.b16 %v42
    %v186 = vunpack.c.l.b16 %v43
    %v187 = vunpack.c.h.b16 %v43
    %v188 = vunpack.c.l.b16 %v44
    %v189 = vunpack.c.h.b16 %v44
    %v190 = vunpack.c.l.b16 %v45
    %v191 = vunpack.c.h.b16 %v45
    %v192 = vunpack.c.l.b16 %v46
    %v193 = vunpack.c.h.b16 %v46
    %v194 = vunpack.c.l.b16 %v47
    %v195 = vunpack.c.h.b16 %v47
    %v196 = vunpack.c.l.b16 %v48
    %v197 = vunpack.c.h.b16 %v48
    %v198 = vunpack.c.l.b16 %v49
    %v199 = vunpack.c.h.b16 %v49
    %v200 = vunpack.c.l.b16 %v50
    %v201 = vunpack.c.h.b16 %v50
    %v202 = vunpack.c.l.b16 %v51
    %v203 = vunpack.c.h.b16 %v51
    %v204 = vunpack.c.l.b16 %v52
    %v205 = vunpack.c.h.b16 %v52
    %v206 = vunpack.c.l.b16 %v53
    %v207 = vunpack.c.h.b16 %v53
    %v208 = vunpack.c.l.b16 %v54
    %v209 = vunpack.c.h.b16 %v54
    %v210 = vunpack.c.l.b16 %v55
    %v211 = vunpack.c.h.b16 %v55
    %v212 = vunpack.c.l.b16 %v56
    %v213 = vunpack.c.h.b16 %v56
    %v214 = vunpack.c.l.b16 %v57
    %v215 = vunpack.c.h.b16 %v57
    %v216 = vunpack.c.l.b16 %v58
    %v217 = vunpack.c.h.b16 %v58
    %v218 = vunpack.c.l.b16 %v59
    %v219 = vunpack.c.h.b16 %v59
    %v220 = vunpack.c.l.b16 %v60
    %v221 = vunpack.c.h.b16 %v60
    %v222 = vunpack.c.l.b16 %v61
    %v223 = vunpack.c.h.b16 %v61
    %v224 = vunpack.c.l.b16 %v62
    %v225 = vunpack.c.h.b16 %v62
    %v226 = vunpack.c.l.b16 %v63
    %v227 = vunpack.c.h.b16 %v63
    %v228 = vunpack.c.l.b16 %v64
    %v229 = vunpack.c.h.b16 %v64
    %v230 = vunpack.c.l.b16 %v65
    %v231 = vunpack.c.h.b16 %v65
    %v232 = vunpack.c.l.b16 %v66
    %v233 = vunpack.c.h.b16 %v66
    %v234 = vunpack.c.l.b16 %v67
    %v235 = vunpack.c.h.b16 %v67
    %v236 = vunpack.c.l.b16 %v68
    %v237 = vunpack.c.h.b16 %v68
    %v238 = vunpack.c.l.b16 %v69
    %v239 = vunpack.c.h.b16 %v69
    %v240 = vunpack.c.l.b16 %v70
    %v241 = vunpack.c.h.b16 %v70
    %v242 = vunpack.c.l.b16 %v71
    %v243 = vunpack.c.h.b16 %v71
    %v244 = vunpack.c.l.b16 %v72
    %v245 = vunpack.c.h.b16 %v72
    %v246 = vunpack.c.l.b16 %v73
    %v247 = vunpack.c.h.b16 %v73
    %v248 = vunpack.c.l.b16 %v74
    %v249 = vunpack.c.h.b16 %v74
    %v250 = vunpack.c.l.b16 %v75
    %v251 = vunpack.c.h.b16 %v75
    %v252 = vunpack.c.l.b16 %v76
    %v253 = vunpack.c.h.b16 %v76
    %v254 = vunpack.c.l.b16 %v77
    %v255 = vunpack.c.h.b16 %v77
    %v256 = vunpack.c.l.b16 %v78
    %v257 = vunpack.c.h.b16 %v78
    %v258 = vunpack.c.l.b16 %v79
    %v259 = vunpack.c.h.b16 %v79
    %v260 = vunpack.c.l.b16 %v80
    %v261 = vunpack.c.h.b16 %v80
    %v262 = vunpack.c.l.b16 %v81
    %v263 = vunpack.c.h.b16 %v81
    %v264 = vunpack.c.l.b16 %v82
    %v265 = vunpack.c.h.b16 %v82
    %v266 = vunpack.c.l.b16 %v83
    %v267 = vunpack.c.h.b16 %v83
    %v268 = vunpack.c.l.b16 %v84
    %v269 = vunpack.c.h.b16 %v84
    %v270 = vunpack.c.l.b16 %v85
    %v271 = vunpack.c.h.b16 %v85
    %v272 = vunpack.c.l.b16 %v86
    %v273 = vunpack.c.h.b16 %v86
    %v274 = vunpack.c.l.b16 %v87
    %v275 = vunpack.c.h.b16 %v87
    %v276 = vunpack.c.l.b16 %v88
    %v277 = vunpack.c.h.b16 %v88
    %v278 = vunpack.c.l.b16 %v89
    %v279 = vunpack.c.h.b16 %v89
    %v280 = vunpack.c.l.b16 %v90
    %v281 = vunpack.c.h.b16 %v90
    %v282 = vunpack.c.l.b16 %v91
    %v283 = vunpack.c.h.b16 %v91
    %v284 = vunpack.c.l.b16 %v92
    %v285 = vunpack.c.h.b16 %v92
    %v286 = vunpack.c.l.b16 %v93
    %v287 = vunpack.c.h.b16 %v93
    %v288 = vunpack.c.l.b16 %v94
    %v289 = vunpack.c.h.b16 %v94
    %v290 = vunpack.c.l.b16 %v95
    %v291 = vunpack.c.h.b16 %v95
    %v292 = vunpack.c.l.b16 %v96
    %v293 = vunpack.c.h.b16 %v96
    %v294 = vunpack.c.l.b16 %v97
    %v295 = vunpack.c.h.b16 %v97
    %v296 = vunpack.c.l.b16 %v98
    %v297 = vunpack.c.h.b16 %v98
    %v298 = vunpack.c.l.b16 %v99
    %v299 = vunpack.c.h.b16 %v99
    %v300 = vunpack.c.l.b16 %v100
    %v301 = vunpack.c.h.b16 %v100
    %v302 = vunpack.c.l.b16 %v101
    %v303 = vunpack.c.h.b16 %v101
    %v304 = vunpack.c.l.b16 %v102
    %v305 = vunpack.c.h.b16 %v102
    %v306 = vunpack.c.l.b16 %v103
    %v307 = vunpack.c.h.b16 %v103
    %v308 = vpack.c.b16 %v182, %v180
    %v309 = vpack.c.b16 %v183, %v181
    %v310 = vpack.c.b16 %v186, %v184
    %v311 = vpack.c.b16 %v187, %v185
    %v312 = vpack.c.b16 %v190, %v188
    %v313 = vpack.c.b16 %v191, %v189
    %v314 = vpack.c.b16 %v194, %v192
    %v315 = vpack.c.b16 %v195, %v193
    %v316 = vpack.c.b16 %v198, %v196
    %v317 = vpack.c.b16 %v199, %v197
    %v318 = vpack.c.b16 %v202, %v200
    %v319 = vpack.c.b16 %v203, %v201
    %v320 = vpack.c.b16 %v206, %v204
    %v321 = vpack.c.b16 %v207, %v205
    %v322 = vpack.c.b16 %v210, %v208
    %v323 = vpack.c.b16 %v211, %v209
    %v324 = vpack.c.b16 %v214, %v212
    %v325 = vpack.c.b16 %v215, %v213
    %v326 = vpack.c.b16 %v218, %v216
    %v327 = vpack.c.b16 %v219, %v217
    %v328 = vpack.c.b16 %v222, %v220
    %v329 = vpack.c.b16 %v223, %v221
    %v330 = vpack.c.b16 %v226, %v224
    %v331 = vpack.c.b16 %v227, %v225
    %v332 = vpack.c.b16 %v230, %v228
    %v333 = vpack.c.b16 %v231, %v229
    %v334 = vpack.c.b16 %v234, %v232
    %v335 = vpack.c.b16 %v235, %v233
    %v336 = vpack.c.b16 %v238, %v236
    %v337 = vpack.c.b16 %v239, %v237
    %v338 = vpack.c.b16 %v242, %v240
    %v339 = vpack.c.b16 %v243, %v241
    %v340 = vpack.c.b16 %v246, %v244
    %v341 = vpack.c.b16 %v247, %v245
    %v342 = vpack.c.b16 %v250, %v248
    %v343 = vpack.c.b16 %v251, %v249
    %v344 = vpack.c.b16 %v254, %v252
    %v345 = vpack.c.b16 %v255, %v253
    %v346 = vpack.c.b16 %v258, %v256
    %v347 = vpack.c.b16 %v259, %v257
    %v348 = vpack.c.b16 %v262, %v260
    %v349 = vpack.c.b16 %v263, %v261
    %v350 = vpack.c.b16 %v266, %v264
    %v351 = vpack.c.b16 %v267, %v265
    %v352 = vpack.c.b16 %v270, %v268
    %v353 = vpack.c.b16 %v271, %v269
    %v354 = vpack.c.b16 %v274, %v272
    %v355 = vpack.c.b16 %v275, %v273
    %v356 = vpack.c.b16 %v278, %v276
    %v357 = vpack.c.b16 %v279, %v277
    %v358 = vpack.c.b16 %v282, %v280
    %v359 = vpack.c.b16 %v283, %v281
    %v360 = vpack.c.b16 %v286, %v284
    %v361 = vpack.c.b16 %v287, %v285
    %v362 = vpack.c.b16 %v290, %v288
    %v363 = vpack.c.b16 %v291, %v289
    %v364 = vpack.c.b16 %v294, %v292
    %v365 = vpack.c.b16 %v295, %v293
    %v366 = vpack.c.b16 %v298, %v296
    %v367 = vpack.c.b16 %v299, %v297
    %v368 = vpack.c.b16 %v302, %v300
    %v369 = vpack.c.b16 %v303, %v301
    %v370 = vpack.c.b16 %v306, %v304
    %v371 = vpack.c.b16 %v307, %v305
    %436 = vmatprep.subr.bf16.mxu0 %v323
    %437 = vmatpush1.bf16.msra.mxu0 %v322
    %438 = vmatprep.subr.bf16.mxu0 %v321
    %439 = vmatpush1.bf16.msra.mxu0 %v320
    %440 = vmatprep.subr.bf16.mxu0 %v319
    %441 = vmatpush1.bf16.msra.mxu0 %v318
    %442 = vmatprep.subr.bf16.mxu0 %v317
    %443 = vmatpush1.bf16.msra.mxu0 %v316
    %444 = vmatprep.subr.bf16.mxu0 %v315
    %445 = vmatpush1.bf16.msra.mxu0 %v314
    %446 = vmatprep.subr.bf16.mxu0 %v313
    %447 = vmatpush1.bf16.msra.mxu0 %v312
    %448 = vmatprep.subr.bf16.mxu0 %v311
    %449 = vmatpush1.bf16.msra.mxu0 %v310
    %450 = vmatprep.subr.bf16.mxu0 %v309
    %451 = vmatpush1.bf16.msra.mxu0 %v308
    %452 = vmatprep.subr.bf16.mxu0 %v339
    %453 = vmatpush2.bf16.msra.mxu0 %v338
    %454 = vmatprep.subr.bf16.mxu0 %v337
    %455 = vmatpush2.bf16.msra.mxu0 %v336
    %456 = vmatprep.subr.bf16.mxu0 %v335
    %457 = vmatpush2.bf16.msra.mxu0 %v334
    %458 = vmatprep.subr.bf16.mxu0 %v333
    %459 = vmatpush2.bf16.msra.mxu0 %v332
    %460 = vmatprep.subr.bf16.mxu0 %v331
    %461 = vmatpush2.bf16.msra.mxu0 %v330
    %462 = vmatprep.subr.bf16.mxu0 %v329
    %463 = vmatpush2.bf16.msra.mxu0 %v328
    %464 = vmatprep.subr.bf16.mxu0 %v327
    %465 = vmatpush2.bf16.msra.mxu0 %v326
    %466 = vmatprep.subr.bf16.mxu0 %v325
    %467 = vmatpush2.bf16.msra.mxu0 %v324
    %468 = vmatprep.mubr.bf16.mxu0 %v37
    %469 = vmatmul.mubr.bf16.gmra.mxu0 %v36
    %v470 = vpop.f32.mrf.mxu0
    %v471 = vadd.f32 %v109, %v470
    %v472 = vpop.f32.mrf.mxu0
    %v473 = vadd.f32 %v113, %v472
    %v474 = vpop.f32.mrf.mxu0
    %v475 = vpop.f32.mrf.mxu0
    %476 = vdwg.mxu0
    %477 = vmatprep.subr.bf16.mxu0 %v355
    %478 = vmatpush1.bf16.msra.mxu0 %v354
    %479 = vmatprep.subr.bf16.mxu0 %v353
    %480 = vmatpush1.bf16.msra.mxu0 %v352
    %481 = vmatprep.subr.bf16.mxu0 %v351
    %482 = vmatpush1.bf16.msra.mxu0 %v350
    %483 = vmatprep.subr.bf16.mxu0 %v349
    %484 = vmatpush1.bf16.msra.mxu0 %v348
    %485 = vmatprep.subr.bf16.mxu0 %v347
    %486 = vmatpush1.bf16.msra.mxu0 %v346
    %487 = vmatprep.subr.bf16.mxu0 %v345
    %488 = vmatpush1.bf16.msra.mxu0 %v344
    %489 = vmatprep.subr.bf16.mxu0 %v343
    %490 = vmatpush1.bf16.msra.mxu0 %v342
    %491 = vmatprep.subr.bf16.mxu0 %v341
    %492 = vmatpush1.bf16.msra.mxu0 %v340
    %493 = vmatprep.subr.bf16.mxu0 %v371
    %494 = vmatpush2.bf16.msra.mxu0 %v370
    %495 = vmatprep.subr.bf16.mxu0 %v369
    %496 = vmatpush2.bf16.msra.mxu0 %v368
    %497 = vmatprep.subr.bf16.mxu0 %v367
    %498 = vmatpush2.bf16.msra.mxu0 %v366
    %499 = vmatprep.subr.bf16.mxu0 %v365
    %500 = vmatpush2.bf16.msra.mxu0 %v364
    %501 = vmatprep.subr.bf16.mxu0 %v363
    %502 = vmatpush2.bf16.msra.mxu0 %v362
    %503 = vmatprep.subr.bf16.mxu0 %v361
    %504 = vmatpush2.bf16.msra.mxu0 %v360
    %505 = vmatprep.subr.bf16.mxu0 %v359
    %506 = vmatpush2.bf16.msra.mxu0 %v358
    %507 = vmatprep.subr.bf16.mxu0 %v357
    %508 = vmatpush2.bf16.msra.mxu0 %v356
    %509 = vmatprep.mubr.bf16.mxu0 %v39
    %510 = vmatmul.mubr.bf16.gmra.mxu0 %v38
    %v511 = vpop.f32.mrf.mxu0
    %v512 = vadd.f32 %v471, %v511
    %v513 = vpop.f32.mrf.mxu0
    %v514 = vadd.f32 %v473, %v513
    %v515 = vpop.f32.mrf.mxu0
    %v516 = vpop.f32.mrf.mxu0
    %517 = vdwg.mxu0
    %v518 = vmax.f32 %v512, 0.0
    %v519 = vmax.f32 %v514, 0.0
    %520 = vst [vmem:[#allocation2] sm:$0xff] %v518
    %521 = vst [vmem:[#allocation2 + $0x8] sm:$0xff] %v519
    %v522 = vpack.c.bf16 %v518, %v518
    %v523 = vpack.c.bf16 %v519, %v519
    %v524 = vld [vmem:[%s3] sm:$0xff]
    %v525 = vld [vmem:[%s3 + $0x8] sm:$0xff]
    %v526 = vld [vmem:[%s3 + $0x10] sm:$0xff]
    %v527 = vld [vmem:[%s3 + $0x18] sm:$0xff]
    %v528 = vld [vmem:[%s3 + $0x20] sm:$0xff]
    %v529 = vld [vmem:[%s3 + $0x28] sm:$0xff]
    %v530 = vld [vmem:[%s3 + $0x30] sm:$0xff]
    %v531 = vld [vmem:[%s3 + $0x38] sm:$0xff]
    %v532 = vld [vmem:[%s3 + $0x40] sm:$0xff]
    %v533 = vld [vmem:[%s3 + $0x48] sm:$0xff]
    %v534 = vld [vmem:[%s3 + $0x50] sm:$0xff]
    %v535 = vld [vmem:[%s3 + $0x58] sm:$0xff]
    %v536 = vld [vmem:[%s3 + $0x60] sm:$0xff]
    %v537 = vld [vmem:[%s3 + $0x68] sm:$0xff]
    %v538 = vld [vmem:[%s3 + $0x70] sm:$0xff]
    %v539 = vld [vmem:[%s3 + $0x78] sm:$0xff]
    %v540 = vld [vmem:[%s3 + $0x80] sm:$0xff]
    %v541 = vld [vmem:[%s3 + $0x88] sm:$0xff]
    %v542 = vld [vmem:[%s3 + $0x90] sm:$0xff]
    %v543 = vld [vmem:[%s3 + $0x98] sm:$0xff]
    %v544 = vld [vmem:[%s3 + $0xa0] sm:$0xff]
    %v545 = vld [vmem:[%s3 + $0xa8] sm:$0xff]
    %v546 = vld [vmem:[%s3 + $0xb0] sm:$0xff]
    %v547 = vld [vmem:[%s3 + $0xb8] sm:$0xff]
    %v548 = vld [vmem:[%s3 + $0xc0] sm:$0xff]
    %v549 = vld [vmem:[%s3 + $0xc8] sm:$0xff]
    %v550 = vld [vmem:[%s3 + $0xd0] sm:$0xff]
    %v551 = vld [vmem:[%s3 + $0xd8] sm:$0xff]
    %v552 = vld [vmem:[%s3 + $0xe0] sm:$0xff]
    %v553 = vld [vmem:[%s3 + $0xe8] sm:$0xff]
    %v554 = vld [vmem:[%s3 + $0xf0] sm:$0xff]
    %v555 = vld [vmem:[%s3 + $0xf8] sm:$0xff]
    %v556 = vld [vmem:[%s4] sm:$0x3]
    %v558 = vlaneseq
    %v559 = vshrl.u32 %v558, 7
    %v560 = vsub.s32 0, %v559
    %v561 = vrot.slane %v556, %v560
    %v562 = vlaneseq
    %v563 = vshrl.u32 %v562, 7
    %v564 = vsub.s32 1, %v563
    %v565 = vrot.slane %v556, %v564
    %v600 = vunpack.c.l.b16 %v524
    %v601 = vunpack.c.h.b16 %v524
    %v602 = vunpack.c.l.b16 %v525
    %v603 = vunpack.c.h.b16 %v525
    %v604 = vunpack.c.l.b16 %v526
    %v605 = vunpack.c.h.b16 %v526
    %v606 = vunpack.c.l.b16 %v527
    %v607 = vunpack.c.h.b16 %v527
    %v608 = vunpack.c.l.b16 %v528
    %v609 = vunpack.c.h.b16 %v528
    %v610 = vunpack.c.l.b16 %v529
    %v611 = vunpack.c.h.b16 %v529
    %v612 = vunpack.c.l.b16 %v530
    %v613 = vunpack.c.h.b16 %v530
    %v614 = vunpack.c.l.b16 %v531
    %v615 = vunpack.c.h.b16 %v531
    %v616 = vunpack.c.l.b16 %v532
    %v617 = vunpack.c.h.b16 %v532
    %v618 = vunpack.c.l.b16 %v533
    %v619 = vunpack.c.h.b16 %v533
    %v620 = vunpack.c.l.b16 %v534
    %v621 = vunpack.c.h.b16 %v534
    %v622 = vunpack.c.l.b16 %v535
    %v623 = vunpack.c.h.b16 %v535
    %v624 = vunpack.c.l.b16 %v536
    %v625 = vunpack.c.h.b16 %v536
    %v626 = vunpack.c.l.b16 %v537
    %v627 = vunpack.c.h.b16 %v537
    %v628 = vunpack.c.l.b16 %v538
    %v629 = vunpack.c.h.b16 %v538
    %v630 = vunpack.c.l.b16 %v539
    %v631 = vunpack.c.h.b16 %v539
    %v632 = vunpack.c.l.b16 %v540
    %v633 = vunpack.c.h.b16 %v540
    %v634 = vunpack.c.l.b16 %v541
    %v635 = vunpack.c.h.b16 %v541
    %v636 = vunpack.c.l.b16 %v542
    %v637 = vunpack.c.h.b16 %v542
    %v638 = vunpack.c.l.b16 %v543
    %v639 = vunpack.c.h.b16 %v543
    %v640 = vunpack.c.l.b16 %v544
    %v641 = vunpack.c.h.b16 %v544
    %v642 = vunpack.c.l.b16 %v545
    %v643 = vunpack.c.h.b16 %v545
    %v644 = vunpack.c.l.b16 %v546
    %v645 = vunpack.c.h.b16 %v546
    %v646 = vunpack.c.l.b16 %v547
    %v647 = vunpack.c.h.b16 %v547
    %v648 = vunpack.c.l.b16 %v548
    %v649 = vunpack.c.h.b16 %v548
    %v650 = vunpack.c.l.b16 %v549
    %v651 = vunpack.c.h.b16 %v549
    %v652 = vunpack.c.l.b16 %v550
    %v653 = vunpack.c.h.b16 %v550
    %v654 = vunpack.c.l.b16 %v551
    %v655 = vunpack.c.h.b16 %v551
    %v656 = vunpack.c.l.b16 %v552
    %v657 = vunpack.c.h.b16 %v552
    %v658 = vunpack.c.l.b16 %v553
    %v659 = vunpack.c.h.b16 %v553
    %v660 = vunpack.c.l.b16 %v554
    %v661 = vunpack.c.h.b16 %v554
    %v662 = vunpack.c.l.b16 %v555
    %v663 = vunpack.c.h.b16 %v555
    %v664 = vpack.c.b16 %v602, %v600
    %v665 = vpack.c.b16 %v603, %v601
    %v666 = vpack.c.b16 %v606, %v604
    %v667 = vpack.c.b16 %v607, %v605
    %v668 = vpack.c.b16 %v610, %v608
    %v669 = vpack.c.b16 %v611, %v609
    %v670 = vpack.c.b16 %v614, %v612
    %v671 = vpack.c.b16 %v615, %v613
    %v672 = vpack.c.b16 %v618, %v616
    %v673 = vpack.c.b16 %v619, %v617
    %v674 = vpack.c.b16 %v622, %v620
    %v675 = vpack.c.b16 %v623, %v621
    %v676 = vpack.c.b16 %v626, %v624
    %v677 = vpack.c.b16 %v627, %v625
    %v678 = vpack.c.b16 %v630, %v628
    %v679 = vpack.c.b16 %v631, %v629
    %v680 = vpack.c.b16 %v634, %v632
    %v681 = vpack.c.b16 %v635, %v633
    %v682 = vpack.c.b16 %v638, %v636
    %v683 = vpack.c.b16 %v639, %v637
    %v684 = vpack.c.b16 %v642, %v640
    %v685 = vpack.c.b16 %v643, %v641
    %v686 = vpack.c.b16 %v646, %v644
    %v687 = vpack.c.b16 %v647, %v645
    %v688 = vpack.c.b16 %v650, %v648
    %v689 = vpack.c.b16 %v651, %v649
    %v690 = vpack.c.b16 %v654, %v652
    %v691 = vpack.c.b16 %v655, %v653
    %v692 = vpack.c.b16 %v658, %v656
    %v693 = vpack.c.b16 %v659, %v657
    %v694 = vpack.c.b16 %v662, %v660
    %v695 = vpack.c.b16 %v663, %v661
    %728 = vmatprep.subr.bf16.mxu0 %v679
    %729 = vmatpush1.bf16.msra.mxu0 %v678
    %730 = vmatprep.subr.bf16.mxu0 %v677
    %731 = vmatpush1.bf16.msra.mxu0 %v676
    %732 = vmatprep.subr.bf16.mxu0 %v675
    %733 = vmatpush1.bf16.msra.mxu0 %v674
    %734 = vmatprep.subr.bf16.mxu0 %v673
    %735 = vmatpush1.bf16.msra.mxu0 %v672
    %736 = vmatprep.subr.bf16.mxu0 %v671
    %737 = vmatpush1.bf16.msra.mxu0 %v670
    %738 = vmatprep.subr.bf16.mxu0 %v669
    %739 = vmatpush1.bf16.msra.mxu0 %v668
    %740 = vmatprep.subr.bf16.mxu0 %v667
    %741 = vmatpush1.bf16.msra.mxu0 %v666
    %742 = vmatprep.subr.bf16.mxu0 %v665
    %743 = vmatpush1.bf16.msra.mxu0 %v664
    %744 = vmatprep.subr.bf16.mxu0 %v695
    %745 = vmatpush2.bf16.msra.mxu0 %v694
    %746 = vmatprep.subr.bf16.mxu0 %v693
    %747 = vmatpush2.bf16.msra.mxu0 %v692
    %748 = vmatprep.subr.bf16.mxu0 %v691
    %749 = vmatpush2.bf16.msra.mxu0 %v690
    %750 = vmatprep.subr.bf16.mxu0 %v689
    %751 = vmatpush2.bf16.msra.mxu0 %v688
    %752 = vmatprep.subr.bf16.mxu0 %v687
    %753 = vmatpush2.bf16.msra.mxu0 %v686
    %754 = vmatprep.subr.bf16.mxu0 %v685
    %755 = vmatpush2.bf16.msra.mxu0 %v684
    %756 = vmatprep.subr.bf16.mxu0 %v683
    %757 = vmatpush2.bf16.msra.mxu0 %v682
    %758 = vmatprep.subr.bf16.mxu0 %v681
    %759 = vmatpush2.bf16.msra.mxu0 %v680
    %760 = vmatprep.mubr.bf16.mxu0 %v523
    %761 = vmatmul.mubr.bf16.gmra.mxu0 %v522
    %v762 = vpop.f32.mrf.mxu0
    %v763 = vadd.f32 %v561, %v762
    %v764 = vpop.f32.mrf.mxu0
    %v765 = vadd.f32 %v565, %v764
    %v766 = vpop.f32.mrf.mxu0
    %v767 = vpop.f32.mrf.mxu0
    %768 = vdwg.mxu0
    %v769 = vmax.f32 %v763, 0.0
    %v770 = vmax.f32 %v765, 0.0
    %v771 = vpack.c.bf16 %v769, %v769
    %v772 = vpack.c.bf16 %v770, %v770
    %v773 = vld [vmem:[%s5] sm:$0xf]
    %v774 = vld [vmem:[%s5 + $0x4] sm:$0xf]
    %v775 = vld [vmem:[%s5 + $0x8] sm:$0xf]
    %v776 = vld [vmem:[%s5 + $0xc] sm:$0xf]
    %v777 = vld [vmem:[%s5 + $0x10] sm:$0xf]
    %v778 = vld [vmem:[%s5 + $0x14] sm:$0xf]
    %v779 = vld [vmem:[%s5 + $0x18] sm:$0xf]
    %v780 = vld [vmem:[%s5 + $0x1c] sm:$0xf]
    %v781 = vld [vmem:[%s5 + $0x20] sm:$0xf]
    %v782 = vld [vmem:[%s5 + $0x24] sm:$0xf]
    %v783 = vld [vmem:[%s5 + $0x28] sm:$0xf]
    %v784 = vld [vmem:[%s5 + $0x2c] sm:$0xf]
    %v785 = vld [vmem:[%s5 + $0x30] sm:$0xf]
    %v786 = vld [vmem:[%s5 + $0x34] sm:$0xf]
    %v787 = vld [vmem:[%s5 + $0x38] sm:$0xf]
    %v788 = vld [vmem:[%s5 + $0x3c] sm:$0xf]
    %v789 = vld [vmem:[%s5 + $0x40] sm:$0xf]
    %v790 = vld [vmem:[%s5 + $0x44] sm:$0xf]
    %v791 = vld [vmem:[%s5 + $0x48] sm:$0xf]
    %v792 = vld [vmem:[%s5 + $0x4c] sm:$0xf]
    %v793 = vld [vmem:[%s5 + $0x50] sm:$0xf]
    %v794 = vld [vmem:[%s5 + $0x54] sm:$0xf]
    %v795 = vld [vmem:[%s5 + $0x58] sm:$0xf]
    %v796 = vld [vmem:[%s5 + $0x5c] sm:$0xf]
    %v797 = vld [vmem:[%s5 + $0x60] sm:$0xf]
    %v798 = vld [vmem:[%s5 + $0x64] sm:$0xf]
    %v799 = vld [vmem:[%s5 + $0x68] sm:$0xf]
    %v800 = vld [vmem:[%s5 + $0x6c] sm:$0xf]
    %v801 = vld [vmem:[%s5 + $0x70] sm:$0xf]
    %v802 = vld [vmem:[%s5 + $0x74] sm:$0xf]
    %v803 = vld [vmem:[%s5 + $0x78] sm:$0xf]
    %v804 = vld [vmem:[%s5 + $0x7c] sm:$0xf]
    %v805 = vld [vmem:[%s6] sm:$0x1]
    %v807 = vlaneseq
    %v808 = vshrl.u32 %v807, 7
    %v809 = vsub.s32 0, %v808
    %v810 = vrot.slane %v805, %v809
    %v844 = vunpack.c.l.b16 %v773
    %v845 = vunpack.c.l.b16 %v774
    %v846 = vunpack.c.l.b16 %v775
    %v847 = vunpack.c.l.b16 %v776
    %v848 = vunpack.c.l.b16 %v777
    %v849 = vunpack.c.l.b16 %v778
    %v850 = vunpack.c.l.b16 %v779
    %v851 = vunpack.c.l.b16 %v780
    %v852 = vunpack.c.l.b16 %v781
    %v853 = vunpack.c.l.b16 %v782
    %v854 = vunpack.c.l.b16 %v783
    %v855 = vunpack.c.l.b16 %v784
    %v856 = vunpack.c.l.b16 %v785
    %v857 = vunpack.c.l.b16 %v786
    %v858 = vunpack.c.l.b16 %v787
    %v859 = vunpack.c.l.b16 %v788
    %v860 = vunpack.c.l.b16 %v789
    %v861 = vunpack.c.l.b16 %v790
    %v862 = vunpack.c.l.b16 %v791
    %v863 = vunpack.c.l.b16 %v792
    %v864 = vunpack.c.l.b16 %v793
    %v865 = vunpack.c.l.b16 %v794
    %v866 = vunpack.c.l.b16 %v795
    %v867 = vunpack.c.l.b16 %v796
    %v868 = vunpack.c.l.b16 %v797
    %v869 = vunpack.c.l.b16 %v798
    %v870 = vunpack.c.l.b16 %v799
    %v871 = vunpack.c.l.b16 %v800
    %v872 = vunpack.c.l.b16 %v801
    %v873 = vunpack.c.l.b16 %v802
    %v874 = vunpack.c.l.b16 %v803
    %v875 = vunpack.c.l.b16 %v804
    %v876 = vpack.c.b16 %v845, %v844
    %v877 = vpack.c.b16 %v847, %v846
    %v878 = vpack.c.b16 %v849, %v848
    %v879 = vpack.c.b16 %v851, %v850
    %v880 = vpack.c.b16 %v853, %v852
    %v881 = vpack.c.b16 %v855, %v854
    %v882 = vpack.c.b16 %v857, %v856
    %v883 = vpack.c.b16 %v859, %v858
    %v884 = vpack.c.b16 %v861, %v860
    %v885 = vpack.c.b16 %v863, %v862
    %v886 = vpack.c.b16 %v865, %v864
    %v887 = vpack.c.b16 %v867, %v866
    %v888 = vpack.c.b16 %v869, %v868
    %v889 = vpack.c.b16 %v871, %v870
    %v890 = vpack.c.b16 %v873, %v872
    %v891 = vpack.c.b16 %v875, %v874
    %908 = vmatprep.subr.bf16.mxu0 0
    %909 = vmatpush1.bf16.msra.mxu0 %v883
    %910 = vmatprep.subr.bf16.mxu0 0
    %911 = vmatpush1.bf16.msra.mxu0 %v882
    %912 = vmatprep.subr.bf16.mxu0 0
    %913 = vmatpush1.bf16.msra.mxu0 %v881
    %914 = vmatprep.subr.bf16.mxu0 0
    %915 = vmatpush1.bf16.msra.mxu0 %v880
    %916 = vmatprep.subr.bf16.mxu0 0
    %917 = vmatpush1.bf16.msra.mxu0 %v879
    %918 = vmatprep.subr.bf16.mxu0 0
    %919 = vmatpush1.bf16.msra.mxu0 %v878
    %920 = vmatprep.subr.bf16.mxu0 0
    %921 = vmatpush1.bf16.msra.mxu0 %v877
    %922 = vmatprep.subr.bf16.mxu0 0
    %923 = vmatpush1.bf16.msra.mxu0 %v876
    %924 = vmatprep.subr.bf16.mxu0 0
    %925 = vmatpush2.bf16.msra.mxu0 %v891
    %926 = vmatprep.subr.bf16.mxu0 0
    %927 = vmatpush2.bf16.msra.mxu0 %v890
    %928 = vmatprep.subr.bf16.mxu0 0
    %929 = vmatpush2.bf16.msra.mxu0 %v889
    %930 = vmatprep.subr.bf16.mxu0 0
    %931 = vmatpush2.bf16.msra.mxu0 %v888
    %932 = vmatprep.subr.bf16.mxu0 0
    %933 = vmatpush2.bf16.msra.mxu0 %v887
    %934 = vmatprep.subr.bf16.mxu0 0
    %935 = vmatpush2.bf16.msra.mxu0 %v886
    %936 = vmatprep.subr.bf16.mxu0 0
    %937 = vmatpush2.bf16.msra.mxu0 %v885
    %938 = vmatprep.subr.bf16.mxu0 0
    %939 = vmatpush2.bf16.msra.mxu0 %v884
    %940 = vmatprep.mubr.bf16.mxu0 %v772
    %941 = vmatmul.mubr.bf16.gmra.mxu0 %v771
    %v942 = vpop.f32.mrf.mxu0
    %v943 = vadd.f32 %v810, %v942
    %v944 = vpop.f32.mrf.mxu0
    %v945 = vpop.f32.mrf.mxu0
    %v946 = vpop.f32.mrf.mxu0
    %947 = vdwg.mxu0
    %948 = vst [vmem:[#allocation4] sm:$0xff] %v943
    %949 = vmax.xlane.f32.xlu0 %v943
    %v950 = vpop.xlane.xlu0 %949
    %v951 = vsub.f32 %v943, %v950
    %v952 = vmul.f32 %v951, 1.442695
    %v953 = vpow.pop %v952
    %954 = vadd.xlane.f32.xlu0 %v953
    %v955 = vpop.xlane.xlu0 %954
    %v956 = vrcp.pop %v955
    %v957 = vmul.f32 %v953, %v956
    %958 = vst [vmem:[#allocation6] sm:$0xff] %v957
    // Predicated region
    $region30: #{splnet_forward.1} parent=1 // pred_check
      _
    $region31: #{splnet_forward.1} parent=1 // pred_check_branch
      %960 = sbr.rel (0) target = $region33
    $region32: #{splnet_forward.1} parent=1 // pred_region
      %s962 = ssub.s32 256, 256
      %963 = vsyncadd [#allocation3], %s962
      %s965 = sshll.u32 [#allocation2], 4
      %s966 = int_to_ptr.vmem [resolvable:$true] %s965
      %968 = dma.vmem_to_hbm [thread:$0]  %s966, 256, %s7, [#allocation3]
    $region33: #{splnet_forward.1} parent=1 // pred_fallthru
      _
    // Predicated region
    $region34: #{splnet_forward.1} parent=1 // pred_check
      _
    $region35: #{splnet_forward.1} parent=1 // pred_check_branch
      %970 = sbr.rel (0) target = $region37
    $region36: #{splnet_forward.1} parent=1 // pred_region
      %s972 = ssub.s32 128, 128
      %973 = vsyncadd [#allocation5], %s972
      %s975 = sshll.u32 [#allocation4], 4
      %s976 = int_to_ptr.vmem [resolvable:$true] %s975
      %978 = dma.vmem_to_hbm [thread:$0]  %s976, 128, %s8, [#allocation5]
    $region37: #{splnet_forward.1} parent=1 // pred_fallthru
      _
    // Predicated region
    $region38: #{splnet_forward.1} parent=1 // pred_check
      _
    $region39: #{splnet_forward.1} parent=1 // pred_check_branch
      %980 = sbr.rel (0) target = $region41
    $region40: #{splnet_forward.1} parent=1 // pred_region
      %s982 = ssub.s32 128, 128
      %983 = vsyncadd [#allocation5], %s982
      %s985 = sshll.u32 [#allocation6], 4
      %s986 = int_to_ptr.vmem [resolvable:$true] %s985
      %988 = dma.vmem_to_hbm [thread:$0]  %s986, 128, %s9, [#allocation5]
    $region41: #{splnet_forward.1} parent=1 // pred_fallthru
      _
    // Predicated region
    $region42: #{splnet_forward.1} parent=1 // pred_check
      _
    $region43: #{splnet_forward.1} parent=1 // pred_check_branch
      %990 = sbr.rel (0) target = $region45
    $region44: #{splnet_forward.1} parent=1 // pred_region
      %991 = dma.done [#allocation3], 256
    $region45: #{splnet_forward.1} parent=1 // pred_fallthru
      _
    // Predicated region
    $region46: #{splnet_forward.1} parent=1 // pred_check
      _
    $region47: #{splnet_forward.1} parent=1 // pred_check_branch
      %993 = sbr.rel (0) target = $region49
    $region48: #{splnet_forward.1} parent=1 // pred_region
      %994 = dma.done [#allocation5], 128
    $region49: #{splnet_forward.1} parent=1 // pred_fallthru
      _
    // Predicated region
    $region50: #{splnet_forward.1} parent=1 // pred_check
      _
    $region51: #{splnet_forward.1} parent=1 // pred_check_branch
      %996 = sbr.rel (0) target = $region53
    $region52: #{splnet_forward.1} parent=1 // pred_region
      %997 = dma.done [#allocation5], 128
    $region53: #{splnet_forward.1} parent=1 // pred_fallthru
      _
    %998 = vsyncpa [#allocation3], 1
    %999 = vsyncpa [#allocation5], 1

</llo_original>
